<compile_context>
chip_gen: v5e
topology: v5e:2x2
jax: 0.10.0
libtpu: 0.0.40
codegen_flags: <defaults>
</compile_context>

<pallas_src>
import functools

import jax
import jax.numpy as jnp
from jax import lax
from jax.experimental import pallas as pl
from jax.experimental.pallas import tpu as pltpu

_LANE = 128


def _round_up(x, m):
    return (x + m - 1) // m * m


def _vmem_capacity_bytes():
    """Per-TensorCore VMEM capacity; conservative 64 MiB (v7x) fallback."""
    try:
        cap = getattr(pltpu.get_tpu_info(), "vmem_capacity_bytes", None)
        if cap:
            return int(cap)
    except Exception:
        pass
    return 64 * 1024 * 1024


# ----------------------------------------------------------------------------
# Kernels
# ----------------------------------------------------------------------------
def _global_attn_kernel(src_ref, mem_ref, wc_ref, wq_ref, *out_refs,
                        s_valid, approx_recip, emit_align):
    if emit_align:
        attnh_ref, align_ref = out_refs
    else:
        (attnh_ref,) = out_refs

    q = src_ref[0]                       # [TILE_T, Dp] compute dtype
    m = mem_ref[0]                       # [Sp, Dp]     compute dtype

    # score (dot): q @ m^T via NT-orientation dot_general (no transpose).
    scores = lax.dot_general(
        q, m, dimension_numbers=(((1,), (1,)), ((), ())),
        preferred_element_type=jnp.float32)                 # [TILE_T, Sp] f32

    if s_valid < scores.shape[-1]:                          # mask lane padding
        col = lax.broadcasted_iota(jnp.int32, scores.shape, 1)
        scores = jnp.where(col < s_valid, scores, -1e30)

    # softmax over src_len (f32, max-subtracted)
    mx = jnp.max(scores, axis=-1, keepdims=True)
    e = jnp.exp(scores - mx)
    denom = jnp.sum(e, axis=-1, keepdims=True)
    if approx_recip:
        p = e * pl.reciprocal(denom, approx=True)           # EUP slot
    else:
        p = e / denom                                       # bit-tight path

    # cast once for the MXU / align write so the f32 temporaries die early
    p_mm = p.astype(m.dtype)
    if emit_align:
        if align_ref.dtype == p_mm.dtype:
            align_ref[0] = p_mm
        else:
            align_ref[0] = p.astype(align_ref.dtype)

    # context: c = p @ memory_bank (MXU, f32 accumulation)
    c = jnp.dot(p_mm, m, preferred_element_type=jnp.float32)  # [TILE_T, Dp]

    # linear_out on concat([c, q]) then tanh; weights pre-split + pre-transposed
    attn_h = jnp.tanh(
        jnp.dot(c.astype(wc_ref.dtype), wc_ref[...],
                preferred_element_type=jnp.float32)
        + jnp.dot(q, wq_ref[...], preferred_element_type=jnp.float32))
    attnh_ref[0] = attn_h.astype(attnh_ref.dtype)


def _global_attn_one_step_kernel(src_ref, mem_ref, wc_ref, wq_ref, *out_refs,
                                 s_valid, approx_recip, emit_align):
    # Decode path: many batches per grid step; scores/context as VPU
    # broadcast-multiply + reduce (1-row MXU matmuls would waste the MXU and
    # the path is bandwidth-bound anyway).
    if emit_align:
        attnh_ref, align_ref = out_refs
    else:
        (attnh_ref,) = out_refs

    q = src_ref[...]                                # [BT, Dp] compute dtype
    mf = mem_ref[...].astype(jnp.float32)           # [BT, Sp, Dp] f32
    qf = q.astype(jnp.float32)

    scores = jnp.sum(qf[:, None, :] * mf, axis=-1)  # [BT, Sp] lane reduce
    if s_valid < scores.shape[-1]:
        col = lax.broadcasted_iota(jnp.int32, scores.shape, 1)
        scores = jnp.where(col < s_valid, scores, -1e30)

    mx = jnp.max(scores, axis=-1, keepdims=True)
    e = jnp.exp(scores - mx)
    denom = jnp.sum(e, axis=-1, keepdims=True)
    if approx_recip:
        p = e * pl.reciprocal(denom, approx=True)
    else:
        p = e / denom

    if emit_align:
        align_ref[...] = p.astype(align_ref.dtype)

    c = jnp.sum(p[:, :, None] * mf, axis=1)         # [BT, Dp] sublane reduce
    attn_h = jnp.tanh(
        jnp.dot(c.astype(wc_ref.dtype), wc_ref[...],
                preferred_element_type=jnp.float32)
        + jnp.dot(q, wq_ref[...], preferred_element_type=jnp.float32))
    attnh_ref[...] = attn_h.astype(attnh_ref.dtype)


# ----------------------------------------------------------------------------
# Wrapper
# ----------------------------------------------------------------------------
def global_attention_dot(source, memory_bank, w_out, *,
                         compute_dtype=None, align_dtype=None,
                         tile_t=None, return_align=True,
                         torch_layout=True, pad_to_lanes=True,
                         approx_softmax=None):
    """Pallas GlobalAttention forward (attn_type='dot', attn_func='softmax').

    source       [B, T, D] (or [B, D] one-step decode path)
    memory_bank  [B, S, D]
    w_out        [D, 2D]   nn.Linear(2D, D, bias=False).weight  (y = x @ W.T)

    Returns (attn_h, align):
      torch_layout=True (default): [T, B, D] / [T, B, S] (PyTorch layout), or
        [B, D] / [B, S] for the one-step path - matches the nn.Module.
      torch_layout=False: batch-major [B, T, D] / [B, T, S]; skips one extra
        HBM read+write of the largest tensor.
    align_dtype=None -> compute dtype. return_align=False skips the align
    output (the dominant HBM write) and returns None for it.
    """
    one_step = source.ndim == 2
    if one_step:
        source = source[:, None, :]

    B, T, D = source.shape
    Bm, S, Dm = memory_bank.shape
    assert B == Bm and D == Dm and w_out.shape == (D, 2 * D)

    out_dtype = source.dtype
    cdtype = (jnp.dtype(compute_dtype) if compute_dtype is not None
              else jnp.dtype(source.dtype))
    adtype = jnp.dtype(align_dtype) if align_dtype is not None else cdtype
    approx = (cdtype == jnp.dtype(jnp.bfloat16)) if approx_softmax is None \
        else bool(approx_softmax)

    # Lane-dense padding (exact: zero D padding contributes 0 to every matmul;
    # padded S columns are masked to -inf before softmax inside the kernel).
    Dp = _round_up(D, _LANE) if pad_to_lanes else D
    Sp = _round_up(S, _LANE) if pad_to_lanes else S

    src_c = source.astype(cdtype)
    mem_c = memory_bank.astype(cdtype)
    wc_t = jnp.transpose(w_out[:, :D]).astype(cdtype)   # [D, D] context part
    wq_t = jnp.transpose(w_out[:, D:]).astype(cdtype)   # [D, D] query part
    if Dp != D or Sp != S:
        src_c = jnp.pad(src_c, ((0, 0), (0, 0), (0, Dp - D)))
        mem_c = jnp.pad(mem_c, ((0, 0), (0, Sp - S), (0, Dp - D)))
        wc_t = jnp.pad(wc_t, ((0, Dp - D), (0, Dp - D)))
        wq_t = jnp.pad(wq_t, ((0, Dp - D), (0, Dp - D)))

    vmem_cap = _vmem_capacity_bytes()
    vmem_limit = int(vmem_cap * 0.75)   # headroom for compiler scratch (v7x!)
    budget = int(vmem_cap * 0.55)       # budget for our blocks + temporaries
    cbytes = cdtype.itemsize
    obytes = jnp.dtype(out_dtype).itemsize
    abytes = adtype.itemsize if return_align else 0

    # ---------------- one-step (decode) path --------------------------------
    if one_step:
        src2 = src_c[:, 0, :]                                   # [B, Dp]
        fixed = 2 * Dp * Dp * cbytes
        per_b = (2 * Sp * Dp * cbytes        # bank, double-buffered
                 + 3 * Sp * Dp * 4           # f32 bank copy + broadcast product
                 + 2 * Dp * (cbytes + obytes)
                 + Sp * (2 * abytes + 3 * 4) + 8 * Dp)
        bt = max(1, (budget - fixed) // per_b)
        b_tile = B if bt >= B else min(B, max(8, (bt // 8) * 8))
        grid = (pl.cdiv(B, b_tile),)

        kernel = functools.partial(
            _global_attn_one_step_kernel, s_valid=S, approx_recip=approx,
            emit_align=return_align)

        out_shape = [jax.ShapeDtypeStruct((B, Dp), out_dtype)]
        out_specs = [pl.BlockSpec((b_tile, Dp), lambda i: (i, 0))]
        if return_align:
            out_shape.append(jax.ShapeDtypeStruct((B, Sp), adtype))
            out_specs.append(pl.BlockSpec((b_tile, Sp), lambda i: (i, 0)))

        outs = pl.pallas_call(
            kernel,
            out_shape=tuple(out_shape),
            grid=grid,
            in_specs=[
                pl.BlockSpec((b_tile, Dp), lambda i: (i, 0)),
                pl.BlockSpec((b_tile, Sp, Dp), lambda i: (i, 0, 0)),
                pl.BlockSpec((Dp, Dp), lambda i: (0, 0),
                             pipeline_mode=pl.Buffered(1)),
                pl.BlockSpec((Dp, Dp), lambda i: (0, 0),
                             pipeline_mode=pl.Buffered(1)),
            ],
            out_specs=tuple(out_specs),
            compiler_params=pltpu.CompilerParams(
                dimension_semantics=("parallel",),
                vmem_limit_bytes=vmem_limit),
            cost_estimate=pl.CostEstimate(
                flops=int(4 * B * S * D + 4 * B * D * D),
                transcendentals=int(B * S + B * D),
                bytes_accessed=int(B * Dp * cbytes + B * Sp * Dp * cbytes
                                   + 2 * Dp * Dp * cbytes + B * Dp * obytes
                                   + B * Sp * abytes)),
        )(src2, mem_c, wc_t, wq_t)

        if return_align:
            attn_h, align = outs
            return attn_h[:, :D], align[:, :S]
        attn_h = outs[0] if isinstance(outs, (tuple, list)) else outs
        return attn_h[:, :D], None

    # ---------------- tiled tgt_len path -------------------------------------
    sub = 16 if cbytes < 4 else 8            # sublane pack of compute dtype
    if tile_t is None:
        fixed = 2 * Sp * Dp * cbytes + 2 * Dp * Dp * cbytes
        per_row = (2 * Dp * cbytes + 2 * Dp * obytes + 2 * Sp * abytes
                   + 3 * Sp * 4 + 8 * Dp)
        avail = budget - fixed
        raw = max(sub, avail // per_row) if avail > 0 else sub
        raw = min(raw, 512)
        tile_t = T if raw >= T else max(sub, (raw // sub) * sub)
    tile_t = int(max(1, min(tile_t, T)))

    grid = (B, pl.cdiv(T, tile_t))

    kernel = functools.partial(
        _global_attn_kernel, s_valid=S, approx_recip=approx,
        emit_align=return_align)

    out_shape = [jax.ShapeDtypeStruct((B, T, Dp), out_dtype)]
    out_specs = [pl.BlockSpec((1, tile_t, Dp), lambda b, t: (b, t, 0))]
    if return_align:
        out_shape.append(jax.ShapeDtypeStruct((B, T, Sp), adtype))
        out_specs.append(pl.BlockSpec((1, tile_t, Sp), lambda b, t: (b, t, 0)))

    # Memory bank is constant across the inner (fastest) T axis -> resident in
    # VMEM per batch; single-buffer it when there is only one batch.
    mem_pipeline = pl.Buffered(1) if B == 1 else None

    outs = pl.pallas_call(
        kernel,
        out_shape=tuple(out_shape),
        grid=grid,
        in_specs=[
            pl.BlockSpec((1, tile_t, Dp), lambda b, t: (b, t, 0)),
            pl.BlockSpec((1, Sp, Dp), lambda b, t: (b, 0, 0),
                         pipeline_mode=mem_pipeline),
            pl.BlockSpec((Dp, Dp), lambda b, t: (0, 0),
                         pipeline_mode=pl.Buffered(1)),
            pl.BlockSpec((Dp, Dp), lambda b, t: (0, 0),
                         pipeline_mode=pl.Buffered(1)),
        ],
        out_specs=tuple(out_specs),
        compiler_params=pltpu.CompilerParams(
            # Megacore-shard on batch only: on v7x each TensorCore then owns a
            # disjoint set of memory banks instead of duplicating them.
            dimension_semantics=("parallel", "arbitrary"),
            vmem_limit_bytes=vmem_limit),
        cost_estimate=pl.CostEstimate(
            flops=int(4 * B * T * S * D + 4 * B * T * D * D),
            transcendentals=int(B * T * S + B * T * D),
            bytes_accessed=int((B * T * Dp + B * Sp * Dp + 2 * Dp * Dp) * cbytes
                               + B * T * Dp * obytes + B * T * Sp * abytes)),
    )(src_c, mem_c, wc_t, wq_t)

    if return_align:
        attn_h, align = outs
    else:
        attn_h = outs[0] if isinstance(outs, (tuple, list)) else outs
        align = None

    attn_h = attn_h[:, :, :D]
    if align is not None:
        align = align[:, :, :S]
    if torch_layout:
        attn_h = jnp.transpose(attn_h, (1, 0, 2))
        if align is not None:
            align = jnp.transpose(align, (1, 0, 2))
    return attn_h, align


# ----------------------------------------------------------------------------
# Reference + self-test
# ----------------------------------------------------------------------------
def _reference(source, memory_bank, w_out):
    # plain-JAX reference mirroring the PyTorch forward (dot + softmax)
    align = jnp.einsum("btd,bsd->bts", source, memory_bank)
    align = jax.nn.softmax(align, axis=-1)
    c = jnp.einsum("bts,bsd->btd", align, memory_bank)
    concat = jnp.concatenate([c, source], axis=-1)
    attn_h = jnp.tanh(jnp.einsum("btk,dk->btd", concat, w_out))
    return jnp.transpose(attn_h, (1, 0, 2)), jnp.transpose(align, (1, 0, 2))


if __name__ == "__main__":
    key = jax.random.PRNGKey(0)
    k1, k2, k3 = jax.random.split(key, 3)

    batch, tgt_len, src_len, dim = 2, 16, 8, 32

    source = jax.random.normal(k1, (batch, tgt_len, dim), dtype=jnp.float32)
    memory_bank = jax.random.normal(k2, (batch, src_len, dim), dtype=jnp.float32)
    # deterministic init for nn.Linear(dim*2, dim, bias=False) weight
    w_out = (jax.random.normal(k3, (dim, 2 * dim), dtype=jnp.float32)
             * (1.0 / jnp.sqrt(2.0 * dim)))

    ref_h, ref_a = _reference(source, memory_bank, w_out)

    # 1) f32 compute, default lane-padded path
    h1, a1 = global_attention_dot(source, memory_bank, w_out)
    jax.block_until_ready((h1, a1))
    assert h1.shape == (tgt_len, batch, dim)
    assert a1.shape == (tgt_len, batch, src_len)
    assert jnp.allclose(h1, ref_h, atol=1e-5, rtol=1e-5)
    assert jnp.allclose(a1, ref_a, atol=1e-5, rtol=1e-5)

    # 2) f32, unpadded blocks + explicit T tiling (grid = (B, 2))
    h2, a2 = global_attention_dot(source, memory_bank, w_out,
                                  tile_t=8, pad_to_lanes=False)
    jax.block_until_ready((h2, a2))
    assert jnp.allclose(h2, ref_h, atol=1e-5, rtol=1e-5)
    assert jnp.allclose(a2, ref_a, atol=1e-5, rtol=1e-5)

    # 3) bf16 MXU operands, f32 accumulation, bf16 align output
    h3, a3 = global_attention_dot(source, memory_bank, w_out,
                                  compute_dtype=jnp.bfloat16)
    jax.block_until_ready((h3, a3))
    assert jnp.allclose(h3, ref_h, atol=5e-2, rtol=5e-2)
    assert jnp.allclose(a3.astype(jnp.float32), ref_a, atol=5e-2, rtol=5e-2)

    # 4) one-step (2-D source) decode path (batched-per-grid-step kernel)
    h4, a4 = global_attention_dot(source[:, 0, :], memory_bank, w_out)
    jax.block_until_ready((h4, a4))
    assert h4.shape == (batch, dim) and a4.shape == (batch, src_len)
    assert jnp.allclose(h4, ref_h[0], atol=1e-5, rtol=1e-5)
    assert jnp.allclose(a4, ref_a[0], atol=1e-5, rtol=1e-5)

    # 5) perf options: batch-major outputs, align skipped
    h5, a5 = global_attention_dot(source, memory_bank, w_out,
                                  torch_layout=False, return_align=False)
    jax.block_until_ready(h5)
    assert h5.shape == (batch, tgt_len, dim) and a5 is None
    assert jnp.allclose(h5, jnp.transpose(ref_h, (1, 0, 2)), atol=1e-5, rtol=1e-5)

    print("KERNEL_OK")
</pallas_src>

<mosaic_0001>
module attributes {stable_mosaic.version = 11 : i64} {
  func.func @_global_attn_kernel(%arg0: i32, %arg1: i32, %arg2: memref<1x16x128xf32, #tpu.memory_space<vmem>>, %arg3: memref<1x128x128xf32, #tpu.memory_space<vmem>>, %arg4: memref<128x128xf32, #tpu.memory_space<vmem>>, %arg5: memref<128x128xf32, #tpu.memory_space<vmem>>, %arg6: memref<1x16x128xf32, #tpu.memory_space<vmem>>, %arg7: memref<1x16x128xf32, #tpu.memory_space<vmem>>) attributes {dimension_semantics = [#tpu.dimension_semantics<parallel>, #tpu.dimension_semantics<arbitrary>], iteration_bounds = array<i64: 2, 1>, scalar_prefetch = 0 : i64, scratch_operands = 0 : i64, tpu.core_type = #tpu.core_type<tc>, window_params = [{transform_indices = @transform_0, window_bounds = array<i64: 1, 16, 128>}, {transform_indices = @transform_1, window_bounds = array<i64: 1, 128, 128>}, {pipeline_mode = #tpu.pipeline_mode<synchronous>, transform_indices = @transform_2, window_bounds = array<i64: 128, 128>}, {pipeline_mode = #tpu.pipeline_mode<synchronous>, transform_indices = @transform_3, window_bounds = array<i64: 128, 128>}, {transform_indices = @transform_4, window_bounds = array<i64: 1, 16, 128>}, {transform_indices = @transform_5, window_bounds = array<i64: 1, 16, 128>}]} {
    %c0 = arith.constant 0 : index
    %c0_0 = arith.constant 0 : index
    %c0_1 = arith.constant 0 : index
    %0 = vector.load %arg2[%c0, %c0_0, %c0_1] : memref<1x16x128xf32, #tpu.memory_space<vmem>>, vector<1x16x128xf32>
    %1 = vector.shape_cast %0 : vector<1x16x128xf32> to vector<16x128xf32>
    %c0_2 = arith.constant 0 : index
    %c0_3 = arith.constant 0 : index
    %c0_4 = arith.constant 0 : index
    %2 = vector.load %arg3[%c0_2, %c0_3, %c0_4] : memref<1x128x128xf32, #tpu.memory_space<vmem>>, vector<1x128x128xf32>
    %3 = vector.shape_cast %2 : vector<1x128x128xf32> to vector<128x128xf32>
    %cst = arith.constant dense<0.000000e+00> : vector<16x128xf32>
    %4 = tpu.matmul %1, %3, %cst {dimension_numbers = #tpu.dot_dimension_numbers<[1], [1], [0], [0], [0, 0, 1, 0], [], []>} : vector<16x128xf32>, vector<128x128xf32>, vector<16x128xf32> -> vector<16x128xf32>
    %5 = tpu.iota {dimensions = array<i32: 1>} : vector<16x128xi32>
    %c8_i32 = arith.constant 8 : i32
    %6 = vector.broadcast %c8_i32 : i32 to vector<16x128xi32>
    %7 = arith.cmpi slt, %5, %6 : vector<16x128xi32>
    %cst_5 = arith.constant -1.000000e+30 : f32
    %8 = vector.broadcast %cst_5 : f32 to vector<16x128xf32>
    %9 = arith.select %7, %4, %8 : vector<16x128xi1>, vector<16x128xf32>
    %cst_6 = arith.constant dense<0xFF800000> : vector<16xf32>
    %10 = vector.multi_reduction <maximumf>, %9, %cst_6 [1] : vector<16x128xf32> to vector<16xf32>
    %11 = vector.shape_cast %10 : vector<16xf32> to vector<16x1xf32>
    %12 = vector.broadcast %11 : vector<16x1xf32> to vector<16x128xf32>
    %13 = arith.subf %9, %12 : vector<16x128xf32>
    %14 = math.exp %13 : vector<16x128xf32>
    %cst_7 = arith.constant dense<0.000000e+00> : vector<16xf32>
    %15 = vector.multi_reduction <add>, %14, %cst_7 [1] : vector<16x128xf32> to vector<16xf32>
    %16 = vector.shape_cast %15 : vector<16xf32> to vector<16x1xf32>
    %17 = vector.broadcast %16 : vector<16x1xf32> to vector<16x128xf32>
    %18 = arith.divf %14, %17 : vector<16x128xf32>
    %c0_8 = arith.constant 0 : index
    %c0_9 = arith.constant 0 : index
    %c0_10 = arith.constant 0 : index
    %19 = vector.load %arg7[%c0_8, %c0_9, %c0_10] : memref<1x16x128xf32, #tpu.memory_space<vmem>>, vector<1x16x128xf32>
    %20 = vector.shape_cast %19 : vector<1x16x128xf32> to vector<16x128xf32>
    %21 = vector.shape_cast %18 : vector<16x128xf32> to vector<1x16x128xf32>
    tpu.vector_store %arg7[%c0_8, %c0_9, %c0_10], %21 {strides = array<i32>} : memref<1x16x128xf32, #tpu.memory_space<vmem>>, vector<1x16x128xf32>,
    %cst_11 = arith.constant dense<0.000000e+00> : vector<16x128xf32>
    %22 = tpu.matmul %18, %3, %cst_11 {dimension_numbers = #tpu.dot_dimension_numbers<[1], [0], [0], [1], [0, 0, 1, 1], [], []>} : vector<16x128xf32>, vector<128x128xf32>, vector<16x128xf32> -> vector<16x128xf32>
    %c0_12 = arith.constant 0 : index
    %c0_13 = arith.constant 0 : index
    %23 = vector.load %arg4[%c0_12, %c0_13] : memref<128x128xf32, #tpu.memory_space<vmem>>, vector<128x128xf32>
    %cst_14 = arith.constant dense<0.000000e+00> : vector<16x128xf32>
    %24 = tpu.matmul %22, %23, %cst_14 {dimension_numbers = #tpu.dot_dimension_numbers<[1], [0], [0], [1], [0, 0, 1, 1], [], []>} : vector<16x128xf32>, vector<128x128xf32>, vector<16x128xf32> -> vector<16x128xf32>
    %c0_15 = arith.constant 0 : index
    %c0_16 = arith.constant 0 : index
    %25 = vector.load %arg5[%c0_15, %c0_16] : memref<128x128xf32, #tpu.memory_space<vmem>>, vector<128x128xf32>
    %cst_17 = arith.constant dense<0.000000e+00> : vector<16x128xf32>
    %26 = tpu.matmul %1, %25, %cst_17 {dimension_numbers = #tpu.dot_dimension_numbers<[1], [0], [0], [1], [0, 0, 1, 1], [], []>} : vector<16x128xf32>, vector<128x128xf32>, vector<16x128xf32> -> vector<16x128xf32>
    %27 = arith.addf %24, %26 : vector<16x128xf32>
    %28 = math.tanh %27 : vector<16x128xf32>
    %c0_18 = arith.constant 0 : index
    %c0_19 = arith.constant 0 : index
    %c0_20 = arith.constant 0 : index
    %29 = vector.load %arg6[%c0_18, %c0_19, %c0_20] : memref<1x16x128xf32, #tpu.memory_space<vmem>>, vector<1x16x128xf32>
    %30 = vector.shape_cast %29 : vector<1x16x128xf32> to vector<16x128xf32>
    %31 = vector.shape_cast %28 : vector<16x128xf32> to vector<1x16x128xf32>
    tpu.vector_store %arg6[%c0_18, %c0_19, %c0_20], %31 {strides = array<i32>} : memref<1x16x128xf32, #tpu.memory_space<vmem>>, vector<1x16x128xf32>,
    return
  }
  func.func @transform_0(%arg0: i32, %arg1: i32) -> (i32, i32, i32) {
    %c0_i32 = arith.constant 0 : i32
    %c0_i32_0 = arith.constant 0 : i32
    return %arg0, %arg1, %c0_i32 : i32, i32, i32
  }
  func.func @transform_1(%arg0: i32, %arg1: i32) -> (i32, i32, i32) {
    %c0_i32 = arith.constant 0 : i32
    %c0_i32_0 = arith.constant 0 : i32
    %c0_i32_1 = arith.constant 0 : i32
    return %arg0, %c0_i32, %c0_i32_0 : i32, i32, i32
  }
  func.func @transform_2(%arg0: i32, %arg1: i32) -> (i32, i32) {
    %c0_i32 = arith.constant 0 : i32
    %c0_i32_0 = arith.constant 0 : i32
    %c0_i32_1 = arith.constant 0 : i32
    return %c0_i32, %c0_i32_0 : i32, i32
  }
  func.func @transform_3(%arg0: i32, %arg1: i32) -> (i32, i32) {
    %c0_i32 = arith.constant 0 : i32
    %c0_i32_0 = arith.constant 0 : i32
    %c0_i32_1 = arith.constant 0 : i32
    return %c0_i32, %c0_i32_0 : i32, i32
  }
  func.func @transform_4(%arg0: i32, %arg1: i32) -> (i32, i32, i32) {
    %c0_i32 = arith.constant 0 : i32
    %c0_i32_0 = arith.constant 0 : i32
    return %arg0, %arg1, %c0_i32 : i32, i32, i32
  }
  func.func @transform_5(%arg0: i32, %arg1: i32) -> (i32, i32, i32) {
    %c0_i32 = arith.constant 0 : i32
    %c0_i32_0 = arith.constant 0 : i32
    return %arg0, %arg1, %c0_i32 : i32, i32, i32
  }
}

</mosaic_0001>

<llo_original>
// kernel: tpu_custom_call.1
$region0: #{tpu_custom_call.1}
  #allocation0 [shape = 'u32[]', space=smem, size = 0x4, offset = 0x4, fixed_abs, tag = 'smem constant byte address 0x4 - core index']
  #allocation1 [shape = 'u32[72,128]{1,0:T(1,128)}', space=vmem, size = 0x9000, scoped, tag = 'internal scratch']
  %s0 = inlined_call_operand.hbm [shape: f32[2,16,128], index: 0, kind: input, shape index: {}]
  %s1 = inlined_call_operand.hbm [shape: f32[2,128,128], index: 1, kind: input, shape index: {}]
  %s2 = inlined_call_operand.hbm [shape: f32[128,128], index: 2, kind: input, shape index: {}]
  %s3 = inlined_call_operand.hbm [shape: f32[128,128], index: 3, kind: input, shape index: {}]
  %s4 = inlined_call_operand.hbm [shape: f32[2,16,128], index: 4, kind: output, shape index: {0}]
  %s5 = inlined_call_operand.hbm [shape: f32[2,16,128], index: 5, kind: output, shape index: {1}]
  %6 = xla_tuple %s4, %s5
  %s7 = sld [smem:[#allocation0]]
  $region73: #{tpu_custom_call.1} parent=0
    _
  %s9 = ssub.s32 1, %s7
  %s10 = scalar_select 0, %s9, %s7
  $region1: #{tpu_custom_call.1} parent=0
    #allocation2 [shape = 'u8[16384]{0}', space=vmem, size = 0x4000, scoped, tag = 'input window, operand 0']
    #allocation3 [shape = 's32[2]{0}', space=sflag, size = 0x8, scoped, tag = 'scoped memory for tpu_custom_call.1']
    #allocation4 [shape = 's32[2]{0}', space=sflag, size = 0x8, scoped, tag = 'scoped memory for tpu_custom_call.1']
    #allocation5 [shape = 'u8[131072]{0}', space=vmem, size = 0x20000, scoped, tag = 'input window, operand 1']
    #allocation6 [shape = 's32[2]{0}', space=sflag, size = 0x8, scoped, tag = 'scoped memory for tpu_custom_call.1']
    #allocation7 [shape = 'u8[65536]{0}', space=vmem, size = 0x10000, scoped, tag = 'input window, operand 2, single buffered']
    #allocation8 [shape = 'u8[65536]{0}', space=vmem, size = 0x10000, scoped, tag = 'input window, operand 3, single buffered']
    #allocation9 [shape = 's32[1]{0}', space=sflag, size = 0x4, scoped, tag = 'scoped memory for tpu_custom_call.1']
    #allocation10 [shape = 'u8[16384]{0}', space=vmem, size = 0x4000, scoped, tag = 'output window, operand 0']
    #allocation11 [shape = 'u8[16384]{0}', space=vmem, size = 0x4000, scoped, tag = 'output window, operand 1']
    #allocation12 [shape = 's32[2]{0}', space=sflag, size = 0x8, scoped, tag = 'scoped memory for tpu_custom_call.1']
    %11 = vsyncpa [#allocation3], 0
    %s12 = scalar_lea.sflag [#allocation3], 1
    %13 = vsyncpa %s12, 0
    %14 = vsyncpa [#allocation6], 0
    %s15 = scalar_lea.sflag [#allocation6], 1
    %16 = vsyncpa %s15, 0
    %17 = vsyncpa [#allocation9], 0
    %18 = vsyncpa [#allocation4], 0
    %s19 = scalar_lea.sflag [#allocation4], 1
    %20 = vsyncpa %s19, 0
    %21 = vsyncpa [#allocation12], 0
    %s22 = scalar_lea.sflag [#allocation12], 1
    %23 = vsyncpa %s22, 0
    loop: start=0, step=1, limit=4
    $region2: #{tpu_custom_call.1} parent=1 // loop_pre_header
      _
    $region3: #{tpu_custom_call.1} parent=1 // loop_header
      %s25 = sphi 0, %s29
      %p26 = scmp.ge.s32.totalorder %s25, 4
      %s32 = sphi 0, %s44
      %s33 = sphi 0, %s40
      %s34 = sphi 0, %s32
      %s35 = sphi 0, %s33
      %s36 = sphi 0, %s34
      %s37 = sphi 0, %s35
      %s49 = sphi 0, %s51
      %s52 = sphi 0, %s49
      %s53 = sphi 0, %s52
      %s69 = sphi 0, %s53
      %s75 = sphi 0, %s77
      %s78 = sphi 0, %s75
      %s79 = sphi 0, %s78
      %s95 = sphi 0, %s79
      %s99 = sphi 0, %s99
      %s101 = sphi 0, %s99
      %s102 = sphi 0, %s101
      %s116 = sphi 0, %s102
      %s120 = sphi 0, %s120
      %s122 = sphi 0, %s120
      %s123 = sphi 0, %s122
      %s137 = sphi 0, %s123
      %s145 = sphi 0, %s147
      %s148 = sphi 0, %s145
      %s149 = sphi 0, %s148
      %s165 = sphi 0, %s149
      %s173 = sphi 0, %s175
      %s176 = sphi 0, %s173
      %s177 = sphi 0, %s176
      %s193 = sphi 0, %s177
    $region4: #{tpu_custom_call.1} parent=1 // loop_header_branch
      %28 = sbr.rel (%p26) target = $region8
    $region5: #{tpu_custom_call.1} parent=1 // loop_body
      %s30 = ssub.s32 %s25, 1
      %s31 = ssub.s32 %s25, 2
      %s38 = sadd.s32 1, %s33
      %p39 = scmp.ge.s32.totalorder %s38, 1
      %s40 = scalar_select %p39, 0, %s38
      %s41 = sadd.s32 1, %s32
      %s42 = scalar_select %p39, %s41, %s32
      %p43 = scmp.ge.s32.totalorder %s42, 2
      %s44 = scalar_select %p43, 0, %s42
      %s45 = ssub.s32 %s32, %s44
      %s46 = ssub.s32 %s33, %s40
      %s47 = sor.u32 %s45, %s46
      %p48 = scmp.eq.s32.totalorder %s47, 0
      %s50 = sadd.s32 %s49, 1
      %s51 = scalar_select %p48, %s49, %s50
      %p54 = pneg %p48
      %p55 = scmp.eq.s32.totalorder %s25, 1
      %p56 = por %p54, %p55
      %p57 = scmp.ne.s32.totalorder %s49, %s52
      %p58 = scmp.eq.s32.totalorder %s25, 0
      %p59 = por %p57, %p58
      %p60 = scmp.ne.s32.totalorder %s49, %s52
      %p61 = scmp.eq.s32.totalorder %s30, 1
      %p62 = por %p60, %p61
      %p63 = scmp.ne.s32.totalorder %s52, %s53
      %p64 = scmp.eq.s32.totalorder %s30, 0
      %p65 = por %p63, %p64
      %p66 = scmp.ne.s32.totalorder %s52, %s53
      %p67 = scmp.eq.s32.totalorder %s31, 1
      %p68 = por %p66, %p67
      %p70 = scmp.ne.s32.totalorder %s53, %s69
      %p71 = scmp.eq.s32.totalorder %s31, 0
      %p72 = por %p70, %p71
      %s73 = ssub.s32 %s32, %s44
      %p74 = scmp.eq.s32.totalorder %s73, 0
      %s76 = sadd.s32 %s75, 1
      %s77 = scalar_select %p74, %s75, %s76
      %p80 = pneg %p74
      %p81 = scmp.eq.s32.totalorder %s25, 1
      %p82 = por %p80, %p81
      %p83 = scmp.ne.s32.totalorder %s75, %s78
      %p84 = scmp.eq.s32.totalorder %s25, 0
      %p85 = por %p83, %p84
      %p86 = scmp.ne.s32.totalorder %s75, %s78
      %p87 = scmp.eq.s32.totalorder %s30, 1
      %p88 = por %p86, %p87
      %p89 = scmp.ne.s32.totalorder %s78, %s79
      %p90 = scmp.eq.s32.totalorder %s30, 0
      %p91 = por %p89, %p90
      %p92 = scmp.ne.s32.totalorder %s78, %s79
      %p93 = scmp.eq.s32.totalorder %s31, 1
      %p94 = por %p92, %p93
      %p96 = scmp.ne.s32.totalorder %s79, %s95
      %p97 = scmp.eq.s32.totalorder %s31, 0
      %p98 = por %p96, %p97
      %s100 = sadd.s32 %s99, 1
      %p103 = scmp.eq.s32.totalorder %s25, 1
      %p104 = scmp.ne.s32.totalorder %s99, %s101
      %p105 = scmp.eq.s32.totalorder %s25, 0
      %p106 = por %p104, %p105
      %p107 = scmp.ne.s32.totalorder %s99, %s101
      %p108 = scmp.eq.s32.totalorder %s30, 1
      %p109 = por %p107, %p108
      %p110 = scmp.ne.s32.totalorder %s101, %s102
      %p111 = scmp.eq.s32.totalorder %s30, 0
      %p112 = por %p110, %p111
      %p113 = scmp.ne.s32.totalorder %s101, %s102
      %p114 = scmp.eq.s32.totalorder %s31, 1
      %p115 = por %p113, %p114
      %p117 = scmp.ne.s32.totalorder %s102, %s116
      %p118 = scmp.eq.s32.totalorder %s31, 0
      %p119 = por %p117, %p118
      %s121 = sadd.s32 %s120, 1
      %p124 = scmp.eq.s32.totalorder %s25, 1
      %p125 = scmp.ne.s32.totalorder %s120, %s122
      %p126 = scmp.eq.s32.totalorder %s25, 0
      %p127 = por %p125, %p126
      %p128 = scmp.ne.s32.totalorder %s120, %s122
      %p129 = scmp.eq.s32.totalorder %s30, 1
      %p130 = por %p128, %p129
      %p131 = scmp.ne.s32.totalorder %s122, %s123
      %p132 = scmp.eq.s32.totalorder %s30, 0
      %p133 = por %p131, %p132
      %p134 = scmp.ne.s32.totalorder %s122, %s123
      %p135 = scmp.eq.s32.totalorder %s31, 1
      %p136 = por %p134, %p135
      %p138 = scmp.ne.s32.totalorder %s123, %s137
      %p139 = scmp.eq.s32.totalorder %s31, 0
      %p140 = por %p138, %p139
      %s141 = ssub.s32 %s32, %s44
      %s142 = ssub.s32 %s33, %s40
      %s143 = sor.u32 %s141, %s142
      %p144 = scmp.eq.s32.totalorder %s143, 0
      %s146 = sadd.s32 %s145, 1
      %s147 = scalar_select %p144, %s145, %s146
      %p150 = pneg %p144
      %p151 = scmp.eq.s32.totalorder %s25, 1
      %p152 = por %p150, %p151
      %p153 = scmp.ne.s32.totalorder %s145, %s148
      %p154 = scmp.eq.s32.totalorder %s25, 0
      %p155 = por %p153, %p154
      %p156 = scmp.ne.s32.totalorder %s145, %s148
      %p157 = scmp.eq.s32.totalorder %s30, 1
      %p158 = por %p156, %p157
      %p159 = scmp.ne.s32.totalorder %s148, %s149
      %p160 = scmp.eq.s32.totalorder %s30, 0
      %p161 = por %p159, %p160
      %p162 = scmp.ne.s32.totalorder %s148, %s149
      %p163 = scmp.eq.s32.totalorder %s31, 1
      %p164 = por %p162, %p163
      %p166 = scmp.ne.s32.totalorder %s149, %s165
      %p167 = scmp.eq.s32.totalorder %s31, 0
      %p168 = por %p166, %p167
      %s169 = ssub.s32 %s32, %s44
      %s170 = ssub.s32 %s33, %s40
      %s171 = sor.u32 %s169, %s170
      %p172 = scmp.eq.s32.totalorder %s171, 0
      %s174 = sadd.s32 %s173, 1
      %s175 = scalar_select %p172, %s173, %s174
      %p178 = pneg %p172
      %p179 = scmp.eq.s32.totalorder %s25, 1
      %p180 = por %p178, %p179
      %p181 = scmp.ne.s32.totalorder %s173, %s176
      %p182 = scmp.eq.s32.totalorder %s25, 0
      %p183 = por %p181, %p182
      %p184 = scmp.ne.s32.totalorder %s173, %s176
      %p185 = scmp.eq.s32.totalorder %s30, 1
      %p186 = por %p184, %p185
      %p187 = scmp.ne.s32.totalorder %s176, %s177
      %p188 = scmp.eq.s32.totalorder %s30, 0
      %p189 = por %p187, %p188
      %p190 = scmp.ne.s32.totalorder %s176, %s177
      %p191 = scmp.eq.s32.totalorder %s31, 1
      %p192 = por %p190, %p191
      %p194 = scmp.ne.s32.totalorder %s177, %s193
      %p195 = scmp.eq.s32.totalorder %s31, 0
      %p196 = por %p194, %p195
      %p197 = scmp.le.s32.totalorder 1, %s25
      %p198 = scmp.lt.s32.totalorder %s25, 3
      %p199 = pnand %p197, %p198
      %p200 = pneg %p199
      // Predicated region
      $region9: #{tpu_custom_call.1} parent=5 // pred_check
        _
      $region10: #{tpu_custom_call.1} parent=5 // pred_check_branch
        %202 = sbr.rel (%p199) target = $region12
      $region11: #{tpu_custom_call.1} parent=5 // pred_region
        %s203 = ssub.s32 %s25, 1
        // Predicated region
        $region13: #{tpu_custom_call.1} parent=11 // pred_check
          %p204 = pneg %p112
        $region14: #{tpu_custom_call.1} parent=11 // pred_check_branch
          %206 = sbr.rel (%p204) target = $region16
        $region15: #{tpu_custom_call.1} parent=11 // pred_region
          %208 = vsyncadd [#allocation6], 0
          %s209 = sshll.u32 %s2, 4
          %s210 = int_to_ptr.hbm [resolvable:$true] %s209
          %s211 = sshll.u32 [#allocation7], 4
          %s212 = int_to_ptr.vmem [resolvable:$true] %s211
          %217 = dma.hbm_to_vmem [thread:$0]  %s210, 2048, %s212, [#allocation6], 128, 128, 8
        $region16: #{tpu_custom_call.1} parent=11 // pred_fallthru
          _
        // Predicated region
        $region17: #{tpu_custom_call.1} parent=11 // pred_check
          %p218 = pneg %p133
        $region18: #{tpu_custom_call.1} parent=11 // pred_check_branch
          %220 = sbr.rel (%p218) target = $region20
        $region19: #{tpu_custom_call.1} parent=11 // pred_region
          %222 = vsyncadd [#allocation9], 0
          %s223 = sshll.u32 %s3, 4
          %s224 = int_to_ptr.hbm [resolvable:$true] %s223
          %s225 = sshll.u32 [#allocation8], 4
          %s226 = int_to_ptr.vmem [resolvable:$true] %s225
          %231 = dma.hbm_to_vmem [thread:$0]  %s224, 2048, %s226, [#allocation9], 128, 128, 8
        $region20: #{tpu_custom_call.1} parent=11 // pred_fallthru
          _
      $region12: #{tpu_custom_call.1} parent=5 // pred_fallthru
        _
      %p232 = scmp.lt.s32.totalorder %s25, 2
      // Predicated region
      $region21: #{tpu_custom_call.1} parent=5 // pred_check
        %p233 = pneg %p232
      $region22: #{tpu_custom_call.1} parent=5 // pred_check_branch
        %235 = sbr.rel (%p233) target = $region24
      $region23: #{tpu_custom_call.1} parent=5 // pred_region
        // Predicated region
        $region25: #{tpu_custom_call.1} parent=23 // pred_check
          %p236 = pneg %p59
        $region26: #{tpu_custom_call.1} parent=23 // pred_check_branch
          %238 = sbr.rel (%p236) target = $region28
        $region27: #{tpu_custom_call.1} parent=23 // pred_region
          %s239 = sand.u32 %s49, 1
          %s240 = scalar_lea.sflag [#allocation3], %s239
          %s241 = sand.u32 %s49, 1
          %s242 = smul.addr %s241, 16
          %s243 = scalar_lea.vmem [#allocation2], %s242
          %s244 = smul.u32 2, %s33
          %246 = vsyncadd %s240, 0
          %s247 = smul.addr %s32, 2
          %s248 = sadd.s32 %s244, %s247
          %s249 = smul.addr %s248, 8
          %s250 = scalar_lea.hbm %s0, %s249
          %s251 = sshll.u32 %s250, 4
          %s252 = int_to_ptr.hbm [resolvable:$true] %s251
          %s253 = sshll.u32 %s243, 4
          %s254 = int_to_ptr.vmem [resolvable:$true] %s253
          %259 = dma.hbm_to_vmem [thread:$0]  %s252, 256, %s254, %s240, 128, 128, 8
        $region28: #{tpu_custom_call.1} parent=23 // pred_fallthru
          _
        // Predicated region
        $region29: #{tpu_custom_call.1} parent=23 // pred_check
          %p260 = pneg %p85
        $region30: #{tpu_custom_call.1} parent=23 // pred_check_branch
          %262 = sbr.rel (%p260) target = $region32
        $region31: #{tpu_custom_call.1} parent=23 // pred_region
          %s263 = sand.u32 %s25, 1
          %s264 = scalar_lea.sflag [#allocation6], %s263
          %s265 = sand.u32 %s75, 1
          %s266 = smul.addr %s265, 128
          %s267 = scalar_lea.vmem [#allocation5], %s266
          %269 = vsyncadd %s264, 0
          %s270 = smul.addr %s32, 16
          %s271 = smul.addr %s270, 8
          %s272 = scalar_lea.hbm %s1, %s271
          %s273 = sshll.u32 %s272, 4
          %s274 = int_to_ptr.hbm [resolvable:$true] %s273
          %s275 = sshll.u32 %s267, 4
          %s276 = int_to_ptr.vmem [resolvable:$true] %s275
          %281 = dma.hbm_to_vmem [thread:$0]  %s274, 2048, %s276, %s264, 128, 128, 8
        $region32: #{tpu_custom_call.1} parent=23 // pred_fallthru
          _
      $region24: #{tpu_custom_call.1} parent=5 // pred_fallthru
        _
      %p282 = scmp.le.s32.totalorder 1, %s25
      %p283 = scmp.lt.s32.totalorder %s25, 3
      %p284 = pnand %p282, %p283
      %p285 = pneg %p284
      // Predicated region
      $region33: #{tpu_custom_call.1} parent=5 // pred_check
        _
      $region34: #{tpu_custom_call.1} parent=5 // pred_check_branch
        %287 = sbr.rel (%p284) target = $region36
      $region35: #{tpu_custom_call.1} parent=5 // pred_region
        %s288 = ssub.s32 %s25, 1
        %s289 = sand.u32 %s52, 1
        %s290 = scalar_lea.sflag [#allocation3], %s289
        %s291 = sand.u32 %s52, 1
        %s292 = smul.addr %s291, 16
        %s293 = scalar_lea.vmem [#allocation2], %s292
        // Predicated region
        $region37: #{tpu_custom_call.1} parent=35 // pred_check
          %p294 = pneg %p65
        $region38: #{tpu_custom_call.1} parent=35 // pred_check_branch
          %296 = sbr.rel (%p294) target = $region40
        $region39: #{tpu_custom_call.1} parent=35 // pred_region
          %298 = dma.done %s290, 256
        $region40: #{tpu_custom_call.1} parent=35 // pred_fallthru
          _
        %s299 = sand.u32 %s30, 1
        %s300 = scalar_lea.sflag [#allocation6], %s299
        %s301 = sand.u32 %s78, 1
        %s302 = smul.addr %s301, 128
        %s303 = scalar_lea.vmem [#allocation5], %s302
        // Predicated region
        $region41: #{tpu_custom_call.1} parent=35 // pred_check
          %p304 = pneg %p91
        $region42: #{tpu_custom_call.1} parent=35 // pred_check_branch
          %306 = sbr.rel (%p304) target = $region44
        $region43: #{tpu_custom_call.1} parent=35 // pred_region
          %308 = dma.done %s300, 2048
        $region44: #{tpu_custom_call.1} parent=35 // pred_fallthru
          _
        // Predicated region
        $region45: #{tpu_custom_call.1} parent=35 // pred_check
          %p309 = pneg %p112
        $region46: #{tpu_custom_call.1} parent=35 // pred_check_branch
          %311 = sbr.rel (%p309) target = $region48
        $region47: #{tpu_custom_call.1} parent=35 // pred_region
          %313 = dma.done [#allocation6], 2048
        $region48: #{tpu_custom_call.1} parent=35 // pred_fallthru
          _
        // Predicated region
        $region49: #{tpu_custom_call.1} parent=35 // pred_check
          %p314 = pneg %p133
        $region50: #{tpu_custom_call.1} parent=35 // pred_check_branch
          %316 = sbr.rel (%p314) target = $region52
        $region51: #{tpu_custom_call.1} parent=35 // pred_region
          %318 = dma.done [#allocation9], 2048
        $region52: #{tpu_custom_call.1} parent=35 // pred_fallthru
          _
        %s319 = sand.u32 %s52, 1
        %s320 = scalar_lea.sflag [#allocation3], %s319
        %s321 = sand.u32 %s52, 1
        %s322 = smul.addr %s321, 16
        %s323 = scalar_lea.vmem [#allocation2], %s322
        %p324 = pneg %p65
        %p325 = pneg %p62
        %s326 = sand.u32 %s30, 1
        %s327 = scalar_lea.sflag [#allocation6], %s326
        %s328 = sand.u32 %s78, 1
        %s329 = smul.addr %s328, 128
        %s330 = scalar_lea.vmem [#allocation5], %s329
        %p331 = pneg %p91
        %p332 = pneg %p88
        %p333 = pneg %p112
        %p334 = pneg %p109
        %p335 = pneg %p133
        %p336 = pneg %p130
        %p337 = pneg %p161
        %p338 = pneg %p158
        %s339 = sand.u32 %s148, 1
        %s340 = scalar_lea.sflag [#allocation4], %s339
        %s341 = sand.u32 %s148, 1
        %s342 = smul.addr %s341, 16
        %s343 = scalar_lea.vmem [#allocation10], %s342
        %p344 = pneg %p189
        %p345 = pneg %p186
        %s346 = sand.u32 %s176, 1
        %s347 = scalar_lea.sflag [#allocation12], %s346
        %s348 = sand.u32 %s176, 1
        %s349 = smul.addr %s348, 16
        %s350 = scalar_lea.vmem [#allocation11], %s349
        %s351 = smul.u32 2, %s35
        %s352 = smul.u32 2, %s35
        %s353 = smul.u32 2, %s35
        %v354 = vld [vmem:[%s293] sm:$0xff]
        %v355 = vld [vmem:[%s293 + $0x8] sm:$0xff]
        %v356 = vld [vmem:[%s303] sm:$0xff]
        %v357 = vld [vmem:[%s303 + $0x8] sm:$0xff]
        %v358 = vld [vmem:[%s303 + $0x10] sm:$0xff]
        %v359 = vld [vmem:[%s303 + $0x18] sm:$0xff]
        %v360 = vld [vmem:[%s303 + $0x20] sm:$0xff]
        %v361 = vld [vmem:[%s303 + $0x28] sm:$0xff]
        %v362 = vld [vmem:[%s303 + $0x30] sm:$0xff]
        %v363 = vld [vmem:[%s303 + $0x38] sm:$0xff]
        %v364 = vld [vmem:[%s303 + $0x40] sm:$0xff]
        %v365 = vld [vmem:[%s303 + $0x48] sm:$0xff]
        %v366 = vld [vmem:[%s303 + $0x50] sm:$0xff]
        %v367 = vld [vmem:[%s303 + $0x58] sm:$0xff]
        %v368 = vld [vmem:[%s303 + $0x60] sm:$0xff]
        %v369 = vld [vmem:[%s303 + $0x68] sm:$0xff]
        %v370 = vld [vmem:[%s303 + $0x70] sm:$0xff]
        %v371 = vld [vmem:[%s303 + $0x78] sm:$0xff]
        %372 = vmatpush.xpose.msra.mxu0 %v371
        %373 = vmatpush.xpose.msra.mxu0 %v370
        %374 = vmatpush.xpose.msra.mxu0 %v369
        %375 = vmatpush.xpose.msra.mxu0 %v368
        %376 = vmatpush.xpose.msra.mxu0 %v367
        %377 = vmatpush.xpose.msra.mxu0 %v366
        %378 = vmatpush.xpose.msra.mxu0 %v365
        %379 = vmatpush.xpose.msra.mxu0 %v364
        %380 = vmatpush.xpose.msra.mxu0 %v363
        %381 = vmatpush.xpose.msra.mxu0 %v362
        %382 = vmatpush.xpose.msra.mxu0 %v361
        %383 = vmatpush.xpose.msra.mxu0 %v360
        %384 = vmatpush.xpose.msra.mxu0 %v359
        %385 = vmatpush.xpose.msra.mxu0 %v358
        %386 = vmatpush.xpose.msra.mxu0 %v357
        %387 = vmatpush.xpose.msra.mxu0 %v356
        %388 = vmatmul.f32.gmra.mxu0 %v354
        %v389 = vpop.f32.mrf.mxu0
        %v390 = vadd.f32 0.0, %v389
        %391 = vmatmul.f32.gmra.mxu0 %v355
        %v392 = vpop.f32.mrf.mxu0
        %v393 = vadd.f32 0.0, %v392
        %394 = vdwg.mxu0
        %v395 = vlaneseq
        %v396 = vand.u32 %v395, 127
        %vm397 = vcmp.lt.s32.totalorder %v396, 8
        %v398 = vsel %vm397, %v390, -1e+30
        %v399 = vsel %vm397, %v393, -1e+30
        %400 = vmax.xlane.f32.xlu0 %v398
        %v401 = vpop.xlane.xlu0 %400
        %402 = vmax.xlane.f32.xlu0 %v399
        %v403 = vpop.xlane.xlu0 %402
        %v404 = vsub.f32 %v398, %v401
        %v405 = vsub.f32 %v399, %v403
        %v406 = vmul.f32 %v404, 1.442695
        %v407 = vpow.pop %v406
        %v408 = vmul.f32 %v405, 1.442695
        %v409 = vpow.pop %v408
        %410 = vadd.xlane.f32.xlu0 %v407
        %v411 = vpop.xlane.xlu0 %410
        %412 = vadd.xlane.f32.xlu0 %v409
        %v413 = vpop.xlane.xlu0 %412
        %v414 = vrcp.pop %v411
        %v415 = vmul.f32 %v411, %v414
        %v416 = vsub.f32 1.0, %v415
        %v417 = vmul.f32 %v414, %v416
        %v418 = vadd.f32 %v414, %v417
        %vm419 = vweird.f32 %v411
        %vm420 = vweird.f32 %v414
        %vm421 = vmor %vm419, %vm420
        %v422 = vsel %vm421, %v414, %v418
        %v423 = vand.u32 2147483647, %v411
        %vm424 = vcmp.eq.f32.partialorder %v423, 8.507059e+37
        %v425 = vand.u32 %v411, 2147483648
        %v426 = vor.u32 1.1754944e-38, %v425
        %v427 = vsel %vm424, %v426, %v422
        %v428 = vmul.f32 %v407, %v427
        %v429 = vrcp.pop %v413
        %v430 = vmul.f32 %v413, %v429
        %v431 = vsub.f32 1.0, %v430
        %v432 = vmul.f32 %v429, %v431
        %v433 = vadd.f32 %v429, %v432
        %vm434 = vweird.f32 %v413
        %vm435 = vweird.f32 %v429
        %vm436 = vmor %vm434, %vm435
        %v437 = vsel %vm436, %v429, %v433
        %v438 = vand.u32 2147483647, %v413
        %vm439 = vcmp.eq.f32.partialorder %v438, 8.507059e+37
        %v440 = vand.u32 %v413, 2147483648
        %v441 = vor.u32 1.1754944e-38, %v440
        %v442 = vsel %vm439, %v441, %v437
        %v443 = vmul.f32 %v409, %v442
        %444 = vst [vmem:[%s350] sm:$0xff] %v428
        %445 = vst [vmem:[%s350 + $0x8] sm:$0xff] %v443
        %446 = vmatpush.msra.mxu0 %v371
        %447 = vmatpush.msra.mxu0 %v370
        %448 = vmatpush.msra.mxu0 %v369
        %449 = vmatpush.msra.mxu0 %v368
        %450 = vmatpush.msra.mxu0 %v367
        %451 = vmatpush.msra.mxu0 %v366
        %452 = vmatpush.msra.mxu0 %v365
        %453 = vmatpush.msra.mxu0 %v364
        %454 = vmatpush.msra.mxu0 %v363
        %455 = vmatpush.msra.mxu0 %v362
        %456 = vmatpush.msra.mxu0 %v361
        %457 = vmatpush.msra.mxu0 %v360
        %458 = vmatpush.msra.mxu0 %v359
        %459 = vmatpush.msra.mxu0 %v358
        %460 = vmatpush.msra.mxu0 %v357
        %461 = vmatpush.msra.mxu0 %v356
        %462 = vmatmul.f32.gmra.mxu0 %v428
        %v463 = vpop.f32.mrf.mxu0
        %v464 = vadd.f32 0.0, %v463
        %465 = vmatmul.f32.gmra.mxu0 %v443
        %v466 = vpop.f32.mrf.mxu0
        %v467 = vadd.f32 0.0, %v466
        %468 = vdwg.mxu0
        %v469 = vld [vmem:[#allocation7] sm:$0xff]
        %v470 = vld [vmem:[#allocation7 + $0x8] sm:$0xff]
        %v471 = vld [vmem:[#allocation7 + $0x10] sm:$0xff]
        %v472 = vld [vmem:[#allocation7 + $0x18] sm:$0xff]
        %v473 = vld [vmem:[#allocation7 + $0x20] sm:$0xff]
        %v474 = vld [vmem:[#allocation7 + $0x28] sm:$0xff]
        %v475 = vld [vmem:[#allocation7 + $0x30] sm:$0xff]
        %v476 = vld [vmem:[#allocation7 + $0x38] sm:$0xff]
        %v477 = vld [vmem:[#allocation7 + $0x40] sm:$0xff]
        %v478 = vld [vmem:[#allocation7 + $0x48] sm:$0xff]
        %v479 = vld [vmem:[#allocation7 + $0x50] sm:$0xff]
        %v480 = vld [vmem:[#allocation7 + $0x58] sm:$0xff]
        %v481 = vld [vmem:[#allocation7 + $0x60] sm:$0xff]
        %v482 = vld [vmem:[#allocation7 + $0x68] sm:$0xff]
        %v483 = vld [vmem:[#allocation7 + $0x70] sm:$0xff]
        %v484 = vld [vmem:[#allocation7 + $0x78] sm:$0xff]
        %v485 = vld [vmem:[#allocation8] sm:$0xff]
        %v486 = vld [vmem:[#allocation8 + $0x8] sm:$0xff]
        %v487 = vld [vmem:[#allocation8 + $0x10] sm:$0xff]
        %v488 = vld [vmem:[#allocation8 + $0x18] sm:$0xff]
        %v489 = vld [vmem:[#allocation8 + $0x20] sm:$0xff]
        %v490 = vld [vmem:[#allocation8 + $0x28] sm:$0xff]
        %v491 = vld [vmem:[#allocation8 + $0x30] sm:$0xff]
        %v492 = vld [vmem:[#allocation8 + $0x38] sm:$0xff]
        %v493 = vld [vmem:[#allocation8 + $0x40] sm:$0xff]
        %v494 = vld [vmem:[#allocation8 + $0x48] sm:$0xff]
        %v495 = vld [vmem:[#allocation8 + $0x50] sm:$0xff]
        %v496 = vld [vmem:[#allocation8 + $0x58] sm:$0xff]
        %v497 = vld [vmem:[#allocation8 + $0x60] sm:$0xff]
        %v498 = vld [vmem:[#allocation8 + $0x68] sm:$0xff]
        %v499 = vld [vmem:[#allocation8 + $0x70] sm:$0xff]
        %v500 = vld [vmem:[#allocation8 + $0x78] sm:$0xff]
        %501 = vmatpush.msra.mxu0 %v500
        %502 = vmatpush.msra.mxu0 %v499
        %503 = vmatpush.msra.mxu0 %v498
        %504 = vmatpush.msra.mxu0 %v497
        %505 = vmatpush.msra.mxu0 %v496
        %506 = vmatpush.msra.mxu0 %v495
        %507 = vmatpush.msra.mxu0 %v494
        %508 = vmatpush.msra.mxu0 %v493
        %509 = vmatpush.msra.mxu0 %v492
        %510 = vmatpush.msra.mxu0 %v491
        %511 = vmatpush.msra.mxu0 %v490
        %512 = vmatpush.msra.mxu0 %v489
        %513 = vmatpush.msra.mxu0 %v488
        %514 = vmatpush.msra.mxu0 %v487
        %515 = vmatpush.msra.mxu0 %v486
        %516 = vmatpush.msra.mxu0 %v485
        %517 = vmatmul.f32.gmra.mxu0 %v354
        %v518 = vpop.f32.mrf.mxu0
        %v519 = vadd.f32 0.0, %v518
        %520 = vmatmul.f32.gmra.mxu0 %v355
        %v521 = vpop.f32.mrf.mxu0
        %v522 = vadd.f32 0.0, %v521
        %523 = vdwg.mxu0
        %524 = vmatpush.msra.mxu0 %v484
        %525 = vmatpush.msra.mxu0 %v483
        %526 = vmatpush.msra.mxu0 %v482
        %527 = vmatpush.msra.mxu0 %v481
        %528 = vmatpush.msra.mxu0 %v480
        %529 = vmatpush.msra.mxu0 %v479
        %530 = vmatpush.msra.mxu0 %v478
        %531 = vmatpush.msra.mxu0 %v477
        %532 = vmatpush.msra.mxu0 %v476
        %533 = vmatpush.msra.mxu0 %v475
        %534 = vmatpush.msra.mxu0 %v474
        %535 = vmatpush.msra.mxu0 %v473
        %536 = vmatpush.msra.mxu0 %v472
        %537 = vmatpush.msra.mxu0 %v471
        %538 = vmatpush.msra.mxu0 %v470
        %539 = vmatpush.msra.mxu0 %v469
        %540 = vmatmul.f32.gmra.mxu0 %v464
        %v541 = vpop.f32.mrf.mxu0
        %v542 = vadd.f32 %v519, %v541
        %543 = vmatmul.f32.gmra.mxu0 %v467
        %v544 = vpop.f32.mrf.mxu0
        %v545 = vadd.f32 %v522, %v544
        %546 = vdwg.mxu0
        %v547 = vtanh.pop %v542
        %v548 = vtanh.pop %v545
        %549 = vst [vmem:[%s343] sm:$0xff] %v547
        %550 = vst [vmem:[%s343 + $0x8] sm:$0xff] %v548
        %s551 = sand.u32 %s148, 1
        %s552 = scalar_lea.sflag [#allocation4], %s551
        %s553 = sand.u32 %s148, 1
        %s554 = smul.addr %s553, 16
        %s555 = scalar_lea.vmem [#allocation10], %s554
        %s556 = sand.u32 %s176, 1
        %s557 = scalar_lea.sflag [#allocation12], %s556
        %s558 = sand.u32 %s176, 1
        %s559 = smul.addr %s558, 16
        %s560 = scalar_lea.vmem [#allocation11], %s559
        // Predicated region
        $region53: #{tpu_custom_call.1} parent=35 // pred_check
          %p561 = pneg %p158
        $region54: #{tpu_custom_call.1} parent=35 // pred_check_branch
          %563 = sbr.rel (%p561) target = $region56
        $region55: #{tpu_custom_call.1} parent=35 // pred_region
          %s564 = smul.u32 2, %s35
          %566 = vsyncadd %s552, 0
          %s567 = smul.addr %s34, 2
          %s568 = sadd.s32 %s564, %s567
          %s569 = smul.addr %s568, 8
          %s570 = scalar_lea.hbm %s4, %s569
          %s571 = sshll.u32 %s555, 4
          %s572 = int_to_ptr.vmem [resolvable:$true] %s571
          %s573 = sshll.u32 %s570, 4
          %s574 = int_to_ptr.hbm [resolvable:$true] %s573
          %579 = dma.vmem_to_hbm [thread:$0]  %s572, 256, %s574, %s552, 128, 128, 8
        $region56: #{tpu_custom_call.1} parent=35 // pred_fallthru
          _
        // Predicated region
        $region57: #{tpu_custom_call.1} parent=35 // pred_check
          %p580 = pneg %p186
        $region58: #{tpu_custom_call.1} parent=35 // pred_check_branch
          %582 = sbr.rel (%p580) target = $region60
        $region59: #{tpu_custom_call.1} parent=35 // pred_region
          %s583 = smul.u32 2, %s35
          %585 = vsyncadd %s557, 0
          %s586 = smul.addr %s34, 2
          %s587 = sadd.s32 %s583, %s586
          %s588 = smul.addr %s587, 8
          %s589 = scalar_lea.hbm %s5, %s588
          %s590 = sshll.u32 %s560, 4
          %s591 = int_to_ptr.vmem [resolvable:$true] %s590
          %s592 = sshll.u32 %s589, 4
          %s593 = int_to_ptr.hbm [resolvable:$true] %s592
          %598 = dma.vmem_to_hbm [thread:$0]  %s591, 256, %s593, %s557, 128, 128, 8
        $region60: #{tpu_custom_call.1} parent=35 // pred_fallthru
          _
      $region36: #{tpu_custom_call.1} parent=5 // pred_fallthru
        _
      %p599 = scmp.le.s32.totalorder 2, %s25
      // Predicated region
      $region61: #{tpu_custom_call.1} parent=5 // pred_check
        %p600 = pneg %p599
      $region62: #{tpu_custom_call.1} parent=5 // pred_check_branch
        %602 = sbr.rel (%p600) target = $region64
      $region63: #{tpu_custom_call.1} parent=5 // pred_region
        %s603 = ssub.s32 %s25, 2
        // Predicated region
        $region65: #{tpu_custom_call.1} parent=63 // pred_check
          %p604 = pneg %p164
        $region66: #{tpu_custom_call.1} parent=63 // pred_check_branch
          %606 = sbr.rel (%p604) target = $region68
        $region67: #{tpu_custom_call.1} parent=63 // pred_region
          %s607 = sand.u32 %s149, 1
          %s608 = scalar_lea.sflag [#allocation4], %s607
          %s609 = sand.u32 %s149, 1
          %s610 = smul.addr %s609, 16
          %s611 = scalar_lea.vmem [#allocation10], %s610
          %613 = dma.done %s608, 256
        $region68: #{tpu_custom_call.1} parent=63 // pred_fallthru
          _
        // Predicated region
        $region69: #{tpu_custom_call.1} parent=63 // pred_check
          %p614 = pneg %p192
        $region70: #{tpu_custom_call.1} parent=63 // pred_check_branch
          %616 = sbr.rel (%p614) target = $region72
        $region71: #{tpu_custom_call.1} parent=63 // pred_region
          %s617 = sand.u32 %s177, 1
          %s618 = scalar_lea.sflag [#allocation12], %s617
          %s619 = sand.u32 %s177, 1
          %s620 = smul.addr %s619, 16
          %s621 = scalar_lea.vmem [#allocation11], %s620
          %623 = dma.done %s618, 256
        $region72: #{tpu_custom_call.1} parent=63 // pred_fallthru
          _
      $region64: #{tpu_custom_call.1} parent=5 // pred_fallthru
        _
    $region6: #{tpu_custom_call.1} parent=1 // loop_footer
      %s29 = sadd.s32 1, %s25
    $region7: #{tpu_custom_call.1} parent=1 // loop_footer_branch
      %24 = sbr.rel target = $region3
    $region8: #{tpu_custom_call.1} parent=1 // loop_exit
      _
    %624 = vsyncpa [#allocation3], 1
    %s625 = scalar_lea.sflag [#allocation3], 1
    %626 = vsyncpa %s625, 1
    %627 = vsyncpa [#allocation6], 1
    %s628 = scalar_lea.sflag [#allocation6], 1
    %629 = vsyncpa %s628, 1
    %630 = vsyncpa [#allocation9], 1
    %631 = vsyncpa [#allocation4], 1
    %s632 = scalar_lea.sflag [#allocation4], 1
    %633 = vsyncpa %s632, 1
    %634 = vsyncpa [#allocation12], 1
    %s635 = scalar_lea.sflag [#allocation12], 1
    %636 = vsyncpa %s635, 1

</llo_original>
